<compile_context>
chip_gen: v6e
topology: v6e:2x2x1
jax: 0.10.0
libtpu: 0.0.40
codegen_flags: <defaults>
</compile_context>

<pallas_src>
import functools

import jax
import jax.numpy as jnp
from jax.experimental import pallas as pl
from jax.experimental.pallas import tpu as pltpu

EPS = 1e-5


def _round_up(a, b):
    return (a + b - 1) // b * b


# ----------------------------------------------------------------------------- kernel
def _fused_kernel(x_ref, w0_ref, b0_ref, w1_ref, b1_ref, wh_ref, bh_ref,
                  wf_ref, out_ref, *, num_hidden, F, H, W_pad, mm_dtype):
    """Fused conv(=matmul) + all FC layers for one (TM, C*L) row tile.

    BN affines are pre-folded into weights/biases.  Every per-row result (conv
    node, Lay1 node, hidden nodes, LinF node, scores, zero lane-padding) is written
    into one lane-padded output slab `out_ref` of shape (TM, W_pad).
    """
    def mm(a, w):
        # Cast activations to the matmul dtype at the dot boundary only; weights
        # are already in mm_dtype.  Accumulate in f32 on the MXU.
        return jnp.dot(a.astype(mm_dtype), w, preferred_element_type=jnp.float32)

    # conv (block-diag matmul) + folded bn0/bn_cn + ReLU   -> node 0 (in (c,o) order)
    h = jnp.maximum(mm(x_ref[...], w0_ref[...]) + b0_ref[...], 0.0)
    out_ref[:, 0:F] = h

    # Lay1: Linear + (Dropout=id) + folded bn1 + ReLU      -> node 1
    h = jnp.maximum(mm(h, w1_ref[...]) + b1_ref[...], 0.0)
    out_ref[:, F:F + H] = h

    # hidden LayerModels                                    -> nodes 2 .. 1+Lh
    off = F + H
    for i in range(num_hidden):
        h = jnp.maximum(mm(h, wh_ref[i]) + bh_ref[i], 0.0)
        out_ref[:, off + i * H: off + (i + 1) * H] = h
    off += num_hidden * H

    # Widened final matmul: columns = [LinF | LinF*bnF_scale | zero padding]
    #   -> LinF node, scores, and slab padding in one matmul + one store.
    out_ref[:, off:W_pad] = mm(h, wf_ref[...])


# ----------------------------------------------------------------------------- params
def _bn_fold(gamma, beta, mean, var):
    scale = gamma / jnp.sqrt(var + EPS)
    shift = beta - mean * scale
    return scale, shift


def init_params(key, input_size, hidden_size, FClayerNum, ConvSize, ConvSizeOut,
                num_states):
    """Deterministic synthetic parameters matching the module's __init__ shapes."""
    C, L, O, H, S = input_size, ConvSize, ConvSizeOut, hidden_size, num_states
    Lh = FClayerNum - 2
    ks = jax.random.split(key, 32)
    k = iter(ks)

    def kaiming(shape, fan_in, kk):
        return jax.random.normal(kk, shape, jnp.float32) * jnp.sqrt(2.0 / fan_in)

    def bn_params(dim, kk):
        k1, k2, k3, k4 = jax.random.split(kk, 4)
        gamma = 1.0 + 0.1 * jax.random.normal(k1, (dim,), jnp.float32)
        beta = 0.05 * jax.random.normal(k2, (dim,), jnp.float32)
        mean = 0.1 * jax.random.normal(k3, (dim,), jnp.float32)
        var = jax.random.uniform(k4, (dim,), jnp.float32, 0.5, 1.5)
        return gamma, beta, mean, var

    p = {}
    p["bn0"] = bn_params(C, next(k))
    p["cn_w"] = kaiming((O, L), L, next(k))          # Conv1d weight (O, L, 1) -> (O, L)
    p["cn_b"] = jnp.zeros((O,), jnp.float32)
    p["bn_cn"] = bn_params(C * O, next(k))           # feature order (o, c) as in torch
    p["w1"] = kaiming((H, C * O), C * O, next(k))    # Lay1.fc.weight, input order (o, c)
    p["b1"] = jnp.zeros((H,), jnp.float32)
    p["bn1"] = bn_params(H, next(k))
    p["wh"] = jnp.stack([kaiming((H, H), H, next(k)) for _ in range(Lh)])
    p["bh"] = jnp.zeros((Lh, H), jnp.float32)
    p["bnh"] = [bn_params(H, next(k)) for _ in range(Lh)]
    p["wf"] = kaiming((S, H), H, next(k))            # LinF.weight (no bias)
    p["bnF_var"] = jax.random.uniform(next(k), (S,), jnp.float32, 0.5, 1.5)
    p["dims"] = (C, L, O, H, S, Lh)
    return p


def fold_params(params, matmul_dtype=jnp.float32):
    """Host-side prep: fold every eval-mode BN into the adjacent matmul, build the
    block-diagonal conv weight, and widen the final weight with the bnF scale and
    the output-slab lane padding so the whole forward is one fused matmul chain."""
    C, L, O, H, S, Lh = params["dims"]
    assert Lh >= 1, "FClayerNum must be >= 3"  # TODO(synk): support Lh == 0
    F = C * O

    # --- conv as block-diagonal matmul, bn0 folded into its rows ------------------
    s0, b0 = _bn_fold(*params["bn0"])
    wct = params["cn_w"].T                                           # (L, O)
    w0 = jnp.einsum("lo,cd->cldo", wct, jnp.eye(C, dtype=jnp.float32))   # (C,L,C,O)
    w0 = (w0 * s0[:, None, None, None]).reshape(C * L, F)
    bias0 = b0[:, None] * jnp.sum(wct, axis=0)[None, :] + params["cn_b"][None, :]
    bias0 = bias0.reshape(1, F)                                      # (1, C*O) in (c,o)

    # --- bn_cn: permute its (o,c) feature order to the kernel's (c,o), fold in ----
    s_cn, t_cn = _bn_fold(*params["bn_cn"])
    s_cn_co = s_cn.reshape(O, C).T.reshape(F)
    t_cn_co = t_cn.reshape(O, C).T.reshape(F)
    w0 = w0 * s_cn_co[None, :]
    b0f = bias0 * s_cn_co[None, :] + t_cn_co[None, :]

    # --- Lay1: permute input axis (o,c)->(c,o), fold bn1 --------------------------
    s1, t1 = _bn_fold(*params["bn1"])
    w1_co = params["w1"].reshape(H, O, C).transpose(0, 2, 1).reshape(H, F)
    w1 = w1_co.T * s1[None, :]
    b1f = (params["b1"] * s1 + t1)[None, :]

    # --- hidden LayerModels, bnh folded -------------------------------------------
    wh_list, bh_list = [], []
    for i in range(Lh):
        sh, th = _bn_fold(*params["bnh"][i])
        wh_list.append(params["wh"][i].T * sh[None, :])
        bh_list.append(params["bh"][i] * sh + th)
    wh = jnp.stack(wh_list)                                          # (Lh, H, H)
    bhf = jnp.stack(bh_list)[:, None, :]                             # (Lh, 1, H)

    # --- LinF + bnF + slab padding, merged into one widened weight -----------------
    W_total = F + H + Lh * H + 2 * S
    W_pad = _round_up(W_total, 128)
    pad = W_pad - W_total
    wf = params["wf"].T                                              # (H, S)
    bnfs = 1.0 / jnp.sqrt(params["bnF_var"] + EPS)                   # (S,)
    wf_full = jnp.concatenate(
        [wf, wf * bnfs[None, :], jnp.zeros((H, pad), jnp.float32)], axis=1)

    md = matmul_dtype
    return {
        "w0": w0.astype(md), "b0": b0f,
        "w1": w1.astype(md), "b1": b1f,
        "wh": wh.astype(md), "bh": bhf,
        "wf": wf_full.astype(md),
        "dims": (C, L, O, H, S, Lh),
        "W_pad": W_pad,
        "mm_dtype": md,
    }


# ----------------------------------------------------------------------------- forward
def forward(folded, x, bad_channels=(), tile_rows=256):
    C, L, O, H, S, Lh = folded["dims"]
    F = C * O
    W_pad = folded["W_pad"]
    mm_dtype = folded["mm_dtype"]
    is_bf16 = jnp.dtype(mm_dtype) == jnp.dtype(jnp.bfloat16)

    N = x.shape[0]
    x = x.astype(jnp.float32)
    if len(bad_channels):                                # x[:, BadChannels, :] = 0
        x = x.at[:, jnp.asarray(bad_channels), :].set(0.0)
    # In bf16 mode, ship the activation stream (the only per-tile input DMA) as bf16.
    x2d = x.reshape(N, C * L).astype(mm_dtype)

    # row tiling: sublane-aligned tiles (16 for packed bf16, 8 for f32), pad N
    row_align = 16 if is_bf16 else 8
    TM = _round_up(min(tile_rows, _round_up(N, row_align)), row_align)
    N_pad = _round_up(N, TM)
    if N_pad != N:
        x2d = jnp.pad(x2d, ((0, N_pad - N), (0, 0)))

    # slab layout: [conv(F) | lay1(H) | hidden(Lh*H) | linf(S) | scores(S) | pad]
    wf_cols = W_pad - (F + H + Lh * H)
    assert folded["wf"].shape == (H, wf_cols)

    kernel = functools.partial(_fused_kernel, num_hidden=Lh, F=F, H=H,
                               W_pad=W_pad, mm_dtype=mm_dtype)

    def const_spec(shape):
        return pl.BlockSpec(shape, lambda i: (0,) * len(shape))

    slab = pl.pallas_call(
        kernel,
        grid=(N_pad // TM,),
        in_specs=[
            pl.BlockSpec((TM, C * L), lambda i: (i, 0)),   # activations: row-tiled
            const_spec((C * L, F)),                        # w0   (resident)
            const_spec((1, F)),                            # b0
            const_spec((F, H)),                            # w1
            const_spec((1, H)),                            # b1
            const_spec((Lh, H, H)),                        # wh
            const_spec((Lh, 1, H)),                        # bh
            const_spec((H, wf_cols)),                      # [wf | wf*bnF_scale | 0]
        ],
        out_specs=pl.BlockSpec((TM, W_pad), lambda i: (i, 0)),
        out_shape=jax.ShapeDtypeStruct((N_pad, W_pad), jnp.float32),
        compiler_params=pltpu.CompilerParams(
            dimension_semantics=("parallel",)),            # both TCs on v7x
    )(x2d, folded["w0"], folded["b0"], folded["w1"], folded["b1"],
      folded["wh"], folded["bh"], folded["wf"])

    # wrapper-side slicing / layout plumbing only
    slab = slab[:N]
    # conv node is produced in (c,o) order; restore PyTorch flatten order (o,c)
    node_conv = slab[:, 0:F].reshape(N, C, O).transpose(0, 2, 1).reshape(N, F)
    node_lay1 = slab[:, F:F + H]
    off = F + H
    hidden_nodes = [slab[:, off + i * H: off + (i + 1) * H] for i in range(Lh)]
    off += Lh * H
    node_linf = slab[:, off: off + S]
    scores = slab[:, off + S: off + 2 * S]
    return scores, [node_conv, node_lay1] + hidden_nodes + [node_linf]


# ----------------------------------------------------------------------------- reference
def forward_ref(params, x):
    """Pure-JAX eval-mode reference (mirrors the PyTorch forward, f32 highest prec)."""
    P = jax.lax.Precision.HIGHEST
    C, L, O, H, S, Lh = params["dims"]
    N = x.shape[0]
    s0, b0 = _bn_fold(*params["bn0"])
    xb = x * s0[None, :, None] + b0[None, :, None]                    # bn0
    conv = (jnp.einsum("ncl,ol->noc", xb, params["cn_w"], precision=P)
            + params["cn_b"][None, :, None])
    h = conv.reshape(N, O * C)                                        # flatten (o,c)
    s, b = _bn_fold(*params["bn_cn"])
    h = jnp.maximum(h * s + b, 0.0)
    nodes = [h]
    s, b = _bn_fold(*params["bn1"])
    h = jnp.maximum((jnp.dot(h, params["w1"].T, precision=P) + params["b1"]) * s + b,
                    0.0)
    nodes.append(h)
    for i in range(Lh):
        s, b = _bn_fold(*params["bnh"][i])
        h = jnp.maximum(
            (jnp.dot(h, params["wh"][i].T, precision=P) + params["bh"][i]) * s + b,
            0.0)
        nodes.append(h)
    z = jnp.dot(h, params["wf"].T, precision=P)
    nodes.append(z)
    scores = z / jnp.sqrt(params["bnF_var"] + EPS)
    return scores, nodes


def _max_rel_err(a, b):
    scale = jnp.maximum(jnp.max(jnp.abs(b)), 1e-3)
    return float(jnp.max(jnp.abs(a.astype(jnp.float32) - b)) / scale)


# ----------------------------------------------------------------------------- main
if __name__ == "__main__":
    input_size, hidden_size = 16, 32
    FClayerNum, ConvSize, ConvSizeOut, num_states = 4, 8, 4, 8
    N = 64

    key = jax.random.PRNGKey(0)
    kp, kx = jax.random.split(key)
    params = init_params(kp, input_size, hidden_size, FClayerNum, ConvSize,
                         ConvSizeOut, num_states)
    x = jax.random.normal(kx, (N, input_size, ConvSize), jnp.float32)

    scores_ref, nodes_ref = forward_ref(params, x)

    # --- f32-matmul path (tile_rows=32 -> 2 grid steps, exercises the row grid) ---
    folded32 = fold_params(params, jnp.float32)
    scores, x_nodes = forward(folded32, x, tile_rows=32)   # BadChannels=[] default
    scores = jax.block_until_ready(scores)
    x_nodes = [jax.block_until_ready(n) for n in x_nodes]
    assert jnp.all(jnp.isfinite(scores))
    assert _max_rel_err(scores, scores_ref) < 2e-2
    assert len(x_nodes) == len(nodes_ref)
    for a, b in zip(x_nodes, nodes_ref):
        assert a.shape == b.shape
        assert _max_rel_err(a, b) < 2e-2

    # --- bf16-at-the-MXU path (recommended on v5e/v6e), looser numeric check ------
    folded_bf16 = fold_params(params, jnp.bfloat16)
    scores_bf, nodes_bf = forward(folded_bf16, x, tile_rows=32)
    scores_bf = jax.block_until_ready(scores_bf)
    assert jnp.all(jnp.isfinite(scores_bf))
    assert _max_rel_err(scores_bf, scores_ref) < 5e-2
    for a, b in zip(nodes_bf, nodes_ref):
        assert a.shape == b.shape
        assert _max_rel_err(a, b) < 5e-2

    print("KERNEL_OK")
</pallas_src>

<mosaic_0001>
module attributes {stable_mosaic.version = 11 : i64} {
  func.func @_fused_kernel(%arg0: i32, %arg1: memref<32x128xf32, #tpu.memory_space<vmem>>, %arg2: memref<128x64xf32, #tpu.memory_space<vmem>>, %arg3: memref<1x64xf32, #tpu.memory_space<vmem>>, %arg4: memref<64x32xf32, #tpu.memory_space<vmem>>, %arg5: memref<1x32xf32, #tpu.memory_space<vmem>>, %arg6: memref<2x32x32xf32, #tpu.memory_space<vmem>>, %arg7: memref<2x1x32xf32, #tpu.memory_space<vmem>>, %arg8: memref<32x96xf32, #tpu.memory_space<vmem>>, %arg9: memref<32x256xf32, #tpu.memory_space<vmem>>) attributes {dimension_semantics = [#tpu.dimension_semantics<parallel>], iteration_bounds = array<i64: 2>, scalar_prefetch = 0 : i64, scratch_operands = 0 : i64, tpu.core_type = #tpu.core_type<tc>, window_params = [{transform_indices = @transform_0, window_bounds = array<i64: 32, 128>}, {pipeline_mode = #tpu.pipeline_mode<synchronous>, transform_indices = @transform_1, window_bounds = array<i64: 128, 64>}, {pipeline_mode = #tpu.pipeline_mode<synchronous>, transform_indices = @transform_2, window_bounds = array<i64: 1, 64>}, {pipeline_mode = #tpu.pipeline_mode<synchronous>, transform_indices = @transform_3, window_bounds = array<i64: 64, 32>}, {pipeline_mode = #tpu.pipeline_mode<synchronous>, transform_indices = @transform_4, window_bounds = array<i64: 1, 32>}, {pipeline_mode = #tpu.pipeline_mode<synchronous>, transform_indices = @transform_5, window_bounds = array<i64: 2, 32, 32>}, {pipeline_mode = #tpu.pipeline_mode<synchronous>, transform_indices = @transform_6, window_bounds = array<i64: 2, 1, 32>}, {pipeline_mode = #tpu.pipeline_mode<synchronous>, transform_indices = @transform_7, window_bounds = array<i64: 32, 96>}, {transform_indices = @transform_8, window_bounds = array<i64: 32, 256>}]} {
    %c0 = arith.constant 0 : index
    %c0_0 = arith.constant 0 : index
    %0 = vector.load %arg1[%c0, %c0_0] : memref<32x128xf32, #tpu.memory_space<vmem>>, vector<32x128xf32>
    %c0_1 = arith.constant 0 : index
    %c0_2 = arith.constant 0 : index
    %1 = vector.load %arg2[%c0_1, %c0_2] : memref<128x64xf32, #tpu.memory_space<vmem>>, vector<128x64xf32>
    %cst = arith.constant dense<0.000000e+00> : vector<32x64xf32>
    %2 = tpu.matmul %0, %1, %cst {dimension_numbers = #tpu.dot_dimension_numbers<[1], [0], [0], [1], [0, 0, 1, 1], [], []>} : vector<32x128xf32>, vector<128x64xf32>, vector<32x64xf32> -> vector<32x64xf32>
    %c0_3 = arith.constant 0 : index
    %c0_4 = arith.constant 0 : index
    %3 = vector.load %arg3[%c0_3, %c0_4] : memref<1x64xf32, #tpu.memory_space<vmem>>, vector<1x64xf32>
    %4 = vector.broadcast %3 : vector<1x64xf32> to vector<32x64xf32>
    %5 = arith.addf %2, %4 : vector<32x64xf32>
    %cst_5 = arith.constant 0.000000e+00 : f32
    %6 = vector.broadcast %cst_5 : f32 to vector<32x64xf32>
    %7 = arith.maximumf %5, %6 : vector<32x64xf32>
    %c0_6 = arith.constant 0 : index
    %c0_7 = arith.constant 0 : index
    %8 = vector.load %arg9[%c0_6, %c0_7] : memref<32x256xf32, #tpu.memory_space<vmem>>, vector<32x64xf32>
    tpu.vector_store %arg9[%c0_6, %c0_7], %7 {strides = array<i32>} : memref<32x256xf32, #tpu.memory_space<vmem>>, vector<32x64xf32>,
    %c0_8 = arith.constant 0 : index
    %c0_9 = arith.constant 0 : index
    %9 = vector.load %arg4[%c0_8, %c0_9] : memref<64x32xf32, #tpu.memory_space<vmem>>, vector<64x32xf32>
    %cst_10 = arith.constant dense<0.000000e+00> : vector<32x32xf32>
    %10 = tpu.matmul %7, %9, %cst_10 {dimension_numbers = #tpu.dot_dimension_numbers<[1], [0], [0], [1], [0, 0, 1, 1], [], []>} : vector<32x64xf32>, vector<64x32xf32>, vector<32x32xf32> -> vector<32x32xf32>
    %c0_11 = arith.constant 0 : index
    %c0_12 = arith.constant 0 : index
    %11 = vector.load %arg5[%c0_11, %c0_12] : memref<1x32xf32, #tpu.memory_space<vmem>>, vector<1x32xf32>
    %12 = vector.broadcast %11 : vector<1x32xf32> to vector<32x32xf32>
    %13 = arith.addf %10, %12 : vector<32x32xf32>
    %cst_13 = arith.constant 0.000000e+00 : f32
    %14 = vector.broadcast %cst_13 : f32 to vector<32x32xf32>
    %15 = arith.maximumf %13, %14 : vector<32x32xf32>
    %c0_14 = arith.constant 0 : index
    %c64 = arith.constant 64 : index
    %16 = vector.load %arg9[%c0_14, %c64] : memref<32x256xf32, #tpu.memory_space<vmem>>, vector<32x32xf32>
    tpu.vector_store %arg9[%c0_14, %c64], %15 {strides = array<i32>} : memref<32x256xf32, #tpu.memory_space<vmem>>, vector<32x32xf32>,
    %c0_15 = arith.constant 0 : index
    %c0_16 = arith.constant 0 : index
    %c0_17 = arith.constant 0 : index
    %17 = vector.load %arg6[%c0_15, %c0_16, %c0_17] : memref<2x32x32xf32, #tpu.memory_space<vmem>>, vector<1x32x32xf32>
    %18 = vector.shape_cast %17 : vector<1x32x32xf32> to vector<32x32xf32>
    %cst_18 = arith.constant dense<0.000000e+00> : vector<32x32xf32>
    %19 = tpu.matmul %15, %18, %cst_18 {dimension_numbers = #tpu.dot_dimension_numbers<[1], [0], [0], [1], [0, 0, 1, 1], [], []>} : vector<32x32xf32>, vector<32x32xf32>, vector<32x32xf32> -> vector<32x32xf32>
    %c0_19 = arith.constant 0 : index
    %c0_20 = arith.constant 0 : index
    %c0_21 = arith.constant 0 : index
    %20 = vector.load %arg7[%c0_19, %c0_20, %c0_21] : memref<2x1x32xf32, #tpu.memory_space<vmem>>, vector<1x1x32xf32>
    %21 = vector.shape_cast %20 : vector<1x1x32xf32> to vector<1x32xf32>
    %22 = vector.broadcast %21 : vector<1x32xf32> to vector<32x32xf32>
    %23 = arith.addf %19, %22 : vector<32x32xf32>
    %cst_22 = arith.constant 0.000000e+00 : f32
    %24 = vector.broadcast %cst_22 : f32 to vector<32x32xf32>
    %25 = arith.maximumf %23, %24 : vector<32x32xf32>
    %c0_23 = arith.constant 0 : index
    %c96 = arith.constant 96 : index
    %26 = vector.load %arg9[%c0_23, %c96] : memref<32x256xf32, #tpu.memory_space<vmem>>, vector<32x32xf32>
    tpu.vector_store %arg9[%c0_23, %c96], %25 {strides = array<i32>} : memref<32x256xf32, #tpu.memory_space<vmem>>, vector<32x32xf32>,
    %c1 = arith.constant 1 : index
    %c0_24 = arith.constant 0 : index
    %c0_25 = arith.constant 0 : index
    %27 = vector.load %arg6[%c1, %c0_24, %c0_25] : memref<2x32x32xf32, #tpu.memory_space<vmem>>, vector<1x32x32xf32>
    %28 = vector.shape_cast %27 : vector<1x32x32xf32> to vector<32x32xf32>
    %cst_26 = arith.constant dense<0.000000e+00> : vector<32x32xf32>
    %29 = tpu.matmul %25, %28, %cst_26 {dimension_numbers = #tpu.dot_dimension_numbers<[1], [0], [0], [1], [0, 0, 1, 1], [], []>} : vector<32x32xf32>, vector<32x32xf32>, vector<32x32xf32> -> vector<32x32xf32>
    %c1_27 = arith.constant 1 : index
    %c0_28 = arith.constant 0 : index
    %c0_29 = arith.constant 0 : index
    %30 = vector.load %arg7[%c1_27, %c0_28, %c0_29] : memref<2x1x32xf32, #tpu.memory_space<vmem>>, vector<1x1x32xf32>
    %31 = vector.shape_cast %30 : vector<1x1x32xf32> to vector<1x32xf32>
    %32 = vector.broadcast %31 : vector<1x32xf32> to vector<32x32xf32>
    %33 = arith.addf %29, %32 : vector<32x32xf32>
    %cst_30 = arith.constant 0.000000e+00 : f32
    %34 = vector.broadcast %cst_30 : f32 to vector<32x32xf32>
    %35 = arith.maximumf %33, %34 : vector<32x32xf32>
    %c0_31 = arith.constant 0 : index
    %c128 = arith.constant 128 : index
    %36 = vector.load %arg9[%c0_31, %c128] : memref<32x256xf32, #tpu.memory_space<vmem>>, vector<32x32xf32>
    tpu.vector_store %arg9[%c0_31, %c128], %35 {strides = array<i32>} : memref<32x256xf32, #tpu.memory_space<vmem>>, vector<32x32xf32>,
    %c0_32 = arith.constant 0 : index
    %c0_33 = arith.constant 0 : index
    %37 = vector.load %arg8[%c0_32, %c0_33] : memref<32x96xf32, #tpu.memory_space<vmem>>, vector<32x96xf32>
    %cst_34 = arith.constant dense<0.000000e+00> : vector<32x96xf32>
    %38 = tpu.matmul %35, %37, %cst_34 {dimension_numbers = #tpu.dot_dimension_numbers<[1], [0], [0], [1], [0, 0, 1, 1], [], []>} : vector<32x32xf32>, vector<32x96xf32>, vector<32x96xf32> -> vector<32x96xf32>
    %c0_35 = arith.constant 0 : index
    %c160 = arith.constant 160 : index
    %39 = vector.load %arg9[%c0_35, %c160] : memref<32x256xf32, #tpu.memory_space<vmem>>, vector<32x96xf32>
    tpu.vector_store %arg9[%c0_35, %c160], %38 {strides = array<i32>} : memref<32x256xf32, #tpu.memory_space<vmem>>, vector<32x96xf32>,
    return
  }
  func.func @transform_0(%arg0: i32) -> (i32, i32) {
    %c0_i32 = arith.constant 0 : i32
    %c0_i32_0 = arith.constant 0 : i32
    return %arg0, %c0_i32 : i32, i32
  }
  func.func @transform_1(%arg0: i32) -> (i32, i32) {
    %c0_i32 = arith.constant 0 : i32
    %c0_i32_0 = arith.constant 0 : i32
    %c0_i32_1 = arith.constant 0 : i32
    return %c0_i32, %c0_i32_0 : i32, i32
  }
  func.func @transform_2(%arg0: i32) -> (i32, i32) {
    %c0_i32 = arith.constant 0 : i32
    %c0_i32_0 = arith.constant 0 : i32
    %c0_i32_1 = arith.constant 0 : i32
    return %c0_i32, %c0_i32_0 : i32, i32
  }
  func.func @transform_3(%arg0: i32) -> (i32, i32) {
    %c0_i32 = arith.constant 0 : i32
    %c0_i32_0 = arith.constant 0 : i32
    %c0_i32_1 = arith.constant 0 : i32
    return %c0_i32, %c0_i32_0 : i32, i32
  }
  func.func @transform_4(%arg0: i32) -> (i32, i32) {
    %c0_i32 = arith.constant 0 : i32
    %c0_i32_0 = arith.constant 0 : i32
    %c0_i32_1 = arith.constant 0 : i32
    return %c0_i32, %c0_i32_0 : i32, i32
  }
  func.func @transform_5(%arg0: i32) -> (i32, i32, i32) {
    %c0_i32 = arith.constant 0 : i32
    %c0_i32_0 = arith.constant 0 : i32
    %c0_i32_1 = arith.constant 0 : i32
    %c0_i32_2 = arith.constant 0 : i32
    return %c0_i32, %c0_i32_0, %c0_i32_1 : i32, i32, i32
  }
  func.func @transform_6(%arg0: i32) -> (i32, i32, i32) {
    %c0_i32 = arith.constant 0 : i32
    %c0_i32_0 = arith.constant 0 : i32
    %c0_i32_1 = arith.constant 0 : i32
    %c0_i32_2 = arith.constant 0 : i32
    return %c0_i32, %c0_i32_0, %c0_i32_1 : i32, i32, i32
  }
  func.func @transform_7(%arg0: i32) -> (i32, i32) {
    %c0_i32 = arith.constant 0 : i32
    %c0_i32_0 = arith.constant 0 : i32
    %c0_i32_1 = arith.constant 0 : i32
    return %c0_i32, %c0_i32_0 : i32, i32
  }
  func.func @transform_8(%arg0: i32) -> (i32, i32) {
    %c0_i32 = arith.constant 0 : i32
    %c0_i32_0 = arith.constant 0 : i32
    return %arg0, %c0_i32 : i32, i32
  }
}

</mosaic_0001>

<llo_original>
// kernel: tpu_custom_call.1
$region0: #{tpu_custom_call.1}
  #allocation0 [shape = 'u32[]', space=smem, size = 0x4, offset = 0x4, fixed_abs, tag = 'smem constant byte address 0x4 - core index']
  #allocation1 [shape = 'u32[144,128]{1,0:T(1,128)}', space=vmem, size = 0x12000, scoped, tag = 'internal scratch']
  %s0 = inlined_call_operand.vmem [shape: f32[64,128], index: 0, kind: input, shape index: {}]
  %s1 = inlined_call_operand.vmem [shape: f32[128,64], index: 1, kind: input, shape index: {}]
  %s2 = inlined_call_operand.vmem [shape: f32[1,64], index: 2, kind: input, shape index: {}]
  %s3 = inlined_call_operand.vmem [shape: f32[64,32], index: 3, kind: input, shape index: {}]
  %s4 = inlined_call_operand.vmem [shape: f32[1,32], index: 4, kind: input, shape index: {}]
  %s5 = inlined_call_operand.vmem [shape: f32[2,32,32], index: 5, kind: input, shape index: {}]
  %s6 = inlined_call_operand.vmem [shape: f32[2,1,32], index: 6, kind: input, shape index: {}]
  %s7 = inlined_call_operand.vmem [shape: f32[32,96], index: 7, kind: input, shape index: {}]
  %s8 = inlined_call_operand.hbm [shape: f32[64,256], index: 8, kind: output, shape index: {}]
  %s9 = sld [smem:[#allocation0]]
  $region65: #{tpu_custom_call.1} parent=0
    _
  %s11 = ssub.s32 1, %s9
  %s12 = scalar_select 0, %s11, %s9
  $region1: #{tpu_custom_call.1} parent=0
    #allocation2 [shape = 'u8[65536]{0}', space=vmem, size = 0x10000, scoped, tag = 'output window, operand 0']
    #allocation3 [shape = 's32[2]{0}', space=sflag, size = 0x8, scoped, tag = 'scoped memory for tpu_custom_call.1']
    %13 = vsyncpa [#allocation3], 0
    %s14 = scalar_lea.sflag [#allocation3], 1
    %15 = vsyncpa %s14, 0
    loop: start=0, step=1, limit=4
    $region2: #{tpu_custom_call.1} parent=1 // loop_pre_header
      _
    $region3: #{tpu_custom_call.1} parent=1 // loop_header
      %s17 = sphi 0, %s21
      %p18 = scmp.ge.s32.totalorder %s17, 4
      %s27 = sphi 0, %s29
      %s30 = sphi 0, %s27
      %s31 = sphi 0, %s30
      %s47 = sphi 0, %s31
      %s51 = sphi 0, %s51
      %s53 = sphi 0, %s51
      %s54 = sphi 0, %s53
      %s68 = sphi 0, %s54
      %s72 = sphi 0, %s72
      %s74 = sphi 0, %s72
      %s75 = sphi 0, %s74
      %s89 = sphi 0, %s75
      %s93 = sphi 0, %s93
      %s95 = sphi 0, %s93
      %s96 = sphi 0, %s95
      %s110 = sphi 0, %s96
      %s114 = sphi 0, %s114
      %s116 = sphi 0, %s114
      %s117 = sphi 0, %s116
      %s131 = sphi 0, %s117
      %s135 = sphi 0, %s135
      %s137 = sphi 0, %s135
      %s138 = sphi 0, %s137
      %s152 = sphi 0, %s138
      %s156 = sphi 0, %s156
      %s158 = sphi 0, %s156
      %s159 = sphi 0, %s158
      %s173 = sphi 0, %s159
      %s177 = sphi 0, %s177
      %s179 = sphi 0, %s177
      %s180 = sphi 0, %s179
      %s194 = sphi 0, %s180
      %s200 = sphi 0, %s202
      %s203 = sphi 0, %s200
      %s204 = sphi 0, %s203
      %s220 = sphi 0, %s204
    $region4: #{tpu_custom_call.1} parent=1 // loop_header_branch
      %20 = sbr.rel (%p18) target = $region8
    $region5: #{tpu_custom_call.1} parent=1 // loop_body
      %s22 = ssub.s32 %s17, 1
      %s23 = ssub.s32 %s17, 2
      %s24 = sadd.s32 %s17, 1
      %s25 = ssub.s32 %s17, %s24
      %p26 = scmp.eq.s32.totalorder %s25, 0
      %s28 = sadd.s32 %s27, 1
      %s29 = scalar_select %p26, %s27, %s28
      %p32 = pneg %p26
      %p33 = scmp.eq.s32.totalorder %s17, 1
      %p34 = por %p32, %p33
      %p35 = scmp.ne.s32.totalorder %s27, %s30
      %p36 = scmp.eq.s32.totalorder %s17, 0
      %p37 = por %p35, %p36
      %p38 = scmp.ne.s32.totalorder %s27, %s30
      %p39 = scmp.eq.s32.totalorder %s22, 1
      %p40 = por %p38, %p39
      %p41 = scmp.ne.s32.totalorder %s30, %s31
      %p42 = scmp.eq.s32.totalorder %s22, 0
      %p43 = por %p41, %p42
      %p44 = scmp.ne.s32.totalorder %s30, %s31
      %p45 = scmp.eq.s32.totalorder %s23, 1
      %p46 = por %p44, %p45
      %p48 = scmp.ne.s32.totalorder %s31, %s47
      %p49 = scmp.eq.s32.totalorder %s23, 0
      %p50 = por %p48, %p49
      %s52 = sadd.s32 %s51, 1
      %p55 = scmp.eq.s32.totalorder %s17, 1
      %p56 = scmp.ne.s32.totalorder %s51, %s53
      %p57 = scmp.eq.s32.totalorder %s17, 0
      %p58 = por %p56, %p57
      %p59 = scmp.ne.s32.totalorder %s51, %s53
      %p60 = scmp.eq.s32.totalorder %s22, 1
      %p61 = por %p59, %p60
      %p62 = scmp.ne.s32.totalorder %s53, %s54
      %p63 = scmp.eq.s32.totalorder %s22, 0
      %p64 = por %p62, %p63
      %p65 = scmp.ne.s32.totalorder %s53, %s54
      %p66 = scmp.eq.s32.totalorder %s23, 1
      %p67 = por %p65, %p66
      %p69 = scmp.ne.s32.totalorder %s54, %s68
      %p70 = scmp.eq.s32.totalorder %s23, 0
      %p71 = por %p69, %p70
      %s73 = sadd.s32 %s72, 1
      %p76 = scmp.eq.s32.totalorder %s17, 1
      %p77 = scmp.ne.s32.totalorder %s72, %s74
      %p78 = scmp.eq.s32.totalorder %s17, 0
      %p79 = por %p77, %p78
      %p80 = scmp.ne.s32.totalorder %s72, %s74
      %p81 = scmp.eq.s32.totalorder %s22, 1
      %p82 = por %p80, %p81
      %p83 = scmp.ne.s32.totalorder %s74, %s75
      %p84 = scmp.eq.s32.totalorder %s22, 0
      %p85 = por %p83, %p84
      %p86 = scmp.ne.s32.totalorder %s74, %s75
      %p87 = scmp.eq.s32.totalorder %s23, 1
      %p88 = por %p86, %p87
      %p90 = scmp.ne.s32.totalorder %s75, %s89
      %p91 = scmp.eq.s32.totalorder %s23, 0
      %p92 = por %p90, %p91
      %s94 = sadd.s32 %s93, 1
      %p97 = scmp.eq.s32.totalorder %s17, 1
      %p98 = scmp.ne.s32.totalorder %s93, %s95
      %p99 = scmp.eq.s32.totalorder %s17, 0
      %p100 = por %p98, %p99
      %p101 = scmp.ne.s32.totalorder %s93, %s95
      %p102 = scmp.eq.s32.totalorder %s22, 1
      %p103 = por %p101, %p102
      %p104 = scmp.ne.s32.totalorder %s95, %s96
      %p105 = scmp.eq.s32.totalorder %s22, 0
      %p106 = por %p104, %p105
      %p107 = scmp.ne.s32.totalorder %s95, %s96
      %p108 = scmp.eq.s32.totalorder %s23, 1
      %p109 = por %p107, %p108
      %p111 = scmp.ne.s32.totalorder %s96, %s110
      %p112 = scmp.eq.s32.totalorder %s23, 0
      %p113 = por %p111, %p112
      %s115 = sadd.s32 %s114, 1
      %p118 = scmp.eq.s32.totalorder %s17, 1
      %p119 = scmp.ne.s32.totalorder %s114, %s116
      %p120 = scmp.eq.s32.totalorder %s17, 0
      %p121 = por %p119, %p120
      %p122 = scmp.ne.s32.totalorder %s114, %s116
      %p123 = scmp.eq.s32.totalorder %s22, 1
      %p124 = por %p122, %p123
      %p125 = scmp.ne.s32.totalorder %s116, %s117
      %p126 = scmp.eq.s32.totalorder %s22, 0
      %p127 = por %p125, %p126
      %p128 = scmp.ne.s32.totalorder %s116, %s117
      %p129 = scmp.eq.s32.totalorder %s23, 1
      %p130 = por %p128, %p129
      %p132 = scmp.ne.s32.totalorder %s117, %s131
      %p133 = scmp.eq.s32.totalorder %s23, 0
      %p134 = por %p132, %p133
      %s136 = sadd.s32 %s135, 1
      %p139 = scmp.eq.s32.totalorder %s17, 1
      %p140 = scmp.ne.s32.totalorder %s135, %s137
      %p141 = scmp.eq.s32.totalorder %s17, 0
      %p142 = por %p140, %p141
      %p143 = scmp.ne.s32.totalorder %s135, %s137
      %p144 = scmp.eq.s32.totalorder %s22, 1
      %p145 = por %p143, %p144
      %p146 = scmp.ne.s32.totalorder %s137, %s138
      %p147 = scmp.eq.s32.totalorder %s22, 0
      %p148 = por %p146, %p147
      %p149 = scmp.ne.s32.totalorder %s137, %s138
      %p150 = scmp.eq.s32.totalorder %s23, 1
      %p151 = por %p149, %p150
      %p153 = scmp.ne.s32.totalorder %s138, %s152
      %p154 = scmp.eq.s32.totalorder %s23, 0
      %p155 = por %p153, %p154
      %s157 = sadd.s32 %s156, 1
      %p160 = scmp.eq.s32.totalorder %s17, 1
      %p161 = scmp.ne.s32.totalorder %s156, %s158
      %p162 = scmp.eq.s32.totalorder %s17, 0
      %p163 = por %p161, %p162
      %p164 = scmp.ne.s32.totalorder %s156, %s158
      %p165 = scmp.eq.s32.totalorder %s22, 1
      %p166 = por %p164, %p165
      %p167 = scmp.ne.s32.totalorder %s158, %s159
      %p168 = scmp.eq.s32.totalorder %s22, 0
      %p169 = por %p167, %p168
      %p170 = scmp.ne.s32.totalorder %s158, %s159
      %p171 = scmp.eq.s32.totalorder %s23, 1
      %p172 = por %p170, %p171
      %p174 = scmp.ne.s32.totalorder %s159, %s173
      %p175 = scmp.eq.s32.totalorder %s23, 0
      %p176 = por %p174, %p175
      %s178 = sadd.s32 %s177, 1
      %p181 = scmp.eq.s32.totalorder %s17, 1
      %p182 = scmp.ne.s32.totalorder %s177, %s179
      %p183 = scmp.eq.s32.totalorder %s17, 0
      %p184 = por %p182, %p183
      %p185 = scmp.ne.s32.totalorder %s177, %s179
      %p186 = scmp.eq.s32.totalorder %s22, 1
      %p187 = por %p185, %p186
      %p188 = scmp.ne.s32.totalorder %s179, %s180
      %p189 = scmp.eq.s32.totalorder %s22, 0
      %p190 = por %p188, %p189
      %p191 = scmp.ne.s32.totalorder %s179, %s180
      %p192 = scmp.eq.s32.totalorder %s23, 1
      %p193 = por %p191, %p192
      %p195 = scmp.ne.s32.totalorder %s180, %s194
      %p196 = scmp.eq.s32.totalorder %s23, 0
      %p197 = por %p195, %p196
      %s198 = ssub.s32 %s17, %s24
      %p199 = scmp.eq.s32.totalorder %s198, 0
      %s201 = sadd.s32 %s200, 1
      %s202 = scalar_select %p199, %s200, %s201
      %p205 = pneg %p199
      %p206 = scmp.eq.s32.totalorder %s17, 1
      %p207 = por %p205, %p206
      %p208 = scmp.ne.s32.totalorder %s200, %s203
      %p209 = scmp.eq.s32.totalorder %s17, 0
      %p210 = por %p208, %p209
      %p211 = scmp.ne.s32.totalorder %s200, %s203
      %p212 = scmp.eq.s32.totalorder %s22, 1
      %p213 = por %p211, %p212
      %p214 = scmp.ne.s32.totalorder %s203, %s204
      %p215 = scmp.eq.s32.totalorder %s22, 0
      %p216 = por %p214, %p215
      %p217 = scmp.ne.s32.totalorder %s203, %s204
      %p218 = scmp.eq.s32.totalorder %s23, 1
      %p219 = por %p217, %p218
      %p221 = scmp.ne.s32.totalorder %s204, %s220
      %p222 = scmp.eq.s32.totalorder %s23, 0
      %p223 = por %p221, %p222
      %p224 = scmp.le.s32.totalorder 1, %s17
      %p225 = scmp.lt.s32.totalorder %s17, 3
      %p226 = pnand %p224, %p225
      %p227 = pneg %p226
      // Predicated region
      $region9: #{tpu_custom_call.1} parent=5 // pred_check
        _
      $region10: #{tpu_custom_call.1} parent=5 // pred_check_branch
        %229 = sbr.rel (%p226) target = $region12
      $region11: #{tpu_custom_call.1} parent=5 // pred_region
        %s230 = ssub.s32 %s17, 1
        // Predicated region
        $region13: #{tpu_custom_call.1} parent=11 // pred_check
          %p231 = pneg %p64
        $region14: #{tpu_custom_call.1} parent=11 // pred_check_branch
          %233 = sbr.rel (%p231) target = $region16
        $region15: #{tpu_custom_call.1} parent=11 // pred_region
          _
        $region16: #{tpu_custom_call.1} parent=11 // pred_fallthru
          _
        // Predicated region
        $region17: #{tpu_custom_call.1} parent=11 // pred_check
          %p234 = pneg %p85
        $region18: #{tpu_custom_call.1} parent=11 // pred_check_branch
          %236 = sbr.rel (%p234) target = $region20
        $region19: #{tpu_custom_call.1} parent=11 // pred_region
          _
        $region20: #{tpu_custom_call.1} parent=11 // pred_fallthru
          _
        // Predicated region
        $region21: #{tpu_custom_call.1} parent=11 // pred_check
          %p237 = pneg %p106
        $region22: #{tpu_custom_call.1} parent=11 // pred_check_branch
          %239 = sbr.rel (%p237) target = $region24
        $region23: #{tpu_custom_call.1} parent=11 // pred_region
          _
        $region24: #{tpu_custom_call.1} parent=11 // pred_fallthru
          _
        // Predicated region
        $region25: #{tpu_custom_call.1} parent=11 // pred_check
          %p240 = pneg %p127
        $region26: #{tpu_custom_call.1} parent=11 // pred_check_branch
          %242 = sbr.rel (%p240) target = $region28
        $region27: #{tpu_custom_call.1} parent=11 // pred_region
          _
        $region28: #{tpu_custom_call.1} parent=11 // pred_fallthru
          _
        // Predicated region
        $region29: #{tpu_custom_call.1} parent=11 // pred_check
          %p243 = pneg %p148
        $region30: #{tpu_custom_call.1} parent=11 // pred_check_branch
          %245 = sbr.rel (%p243) target = $region32
        $region31: #{tpu_custom_call.1} parent=11 // pred_region
          _
        $region32: #{tpu_custom_call.1} parent=11 // pred_fallthru
          _
        // Predicated region
        $region33: #{tpu_custom_call.1} parent=11 // pred_check
          %p246 = pneg %p169
        $region34: #{tpu_custom_call.1} parent=11 // pred_check_branch
          %248 = sbr.rel (%p246) target = $region36
        $region35: #{tpu_custom_call.1} parent=11 // pred_region
          _
        $region36: #{tpu_custom_call.1} parent=11 // pred_fallthru
          _
        // Predicated region
        $region37: #{tpu_custom_call.1} parent=11 // pred_check
          %p249 = pneg %p190
        $region38: #{tpu_custom_call.1} parent=11 // pred_check_branch
          %251 = sbr.rel (%p249) target = $region40
        $region39: #{tpu_custom_call.1} parent=11 // pred_region
          _
        $region40: #{tpu_custom_call.1} parent=11 // pred_fallthru
          _
      $region12: #{tpu_custom_call.1} parent=5 // pred_fallthru
        _
      %p252 = scmp.lt.s32.totalorder %s17, 2
      // Predicated region
      $region41: #{tpu_custom_call.1} parent=5 // pred_check
        %p253 = pneg %p252
      $region42: #{tpu_custom_call.1} parent=5 // pred_check_branch
        %255 = sbr.rel (%p253) target = $region44
      $region43: #{tpu_custom_call.1} parent=5 // pred_region
        // Predicated region
        $region45: #{tpu_custom_call.1} parent=43 // pred_check
          %p256 = pneg %p37
        $region46: #{tpu_custom_call.1} parent=43 // pred_check_branch
          %258 = sbr.rel (%p256) target = $region48
        $region47: #{tpu_custom_call.1} parent=43 // pred_region
          %s259 = smul.u32 4, %s17
          %p260 = scmp.lt.s32.totalorder %s259, 7
          %s261 = scalar_select %p260, %s259, 7
          %s262 = smul.addr %s261, 8
          %s263 = scalar_lea.vmem %s0, %s262
          %s264 = smul.u32 4, %s17
        $region48: #{tpu_custom_call.1} parent=43 // pred_fallthru
          _
      $region44: #{tpu_custom_call.1} parent=5 // pred_fallthru
        _
      %p265 = scmp.le.s32.totalorder 1, %s17
      %p266 = scmp.lt.s32.totalorder %s17, 3
      %p267 = pnand %p265, %p266
      %p268 = pneg %p267
      // Predicated region
      $region49: #{tpu_custom_call.1} parent=5 // pred_check
        _
      $region50: #{tpu_custom_call.1} parent=5 // pred_check_branch
        %270 = sbr.rel (%p267) target = $region52
      $region51: #{tpu_custom_call.1} parent=5 // pred_region
        %s271 = ssub.s32 %s17, 1
        %s272 = smul.u32 4, %s22
        %p273 = scmp.lt.s32.totalorder %s272, 7
        %s274 = scalar_select %p273, %s272, 7
        %s275 = smul.addr %s274, 8
        %s276 = scalar_lea.vmem %s0, %s275
        %p277 = pneg %p43
        %p278 = pneg %p40
        %p279 = pneg %p64
        %p280 = pneg %p61
        %p281 = pneg %p85
        %p282 = pneg %p82
        %p283 = pneg %p106
        %p284 = pneg %p103
        %p285 = pneg %p127
        %p286 = pneg %p124
        %p287 = pneg %p148
        %p288 = pneg %p145
        %p289 = pneg %p169
        %p290 = pneg %p166
        %p291 = pneg %p190
        %p292 = pneg %p187
        %p293 = pneg %p216
        %p294 = pneg %p213
        %s295 = sand.u32 %s203, 1
        %s296 = scalar_lea.sflag [#allocation3], %s295
        %s297 = sand.u32 %s203, 1
        %s298 = smul.addr %s297, 64
        %s299 = scalar_lea.vmem [#allocation2], %s298
        %s300 = smul.u32 4, %s22
        %p301 = scmp.lt.s32.totalorder %s300, 7
        %s302 = scalar_select %p301, %s300, 7
        %s303 = smul.addr %s302, 8
        %s304 = scalar_lea.vmem %s0, %s303
        %s305 = smul.u32 4, %s22
        %s306 = smul.u32 4, %s22
        %v307 = vld [vmem:[%s304] sm:$0xff]
        %v308 = vld [vmem:[%s304 + $0x8] sm:$0xff]
        %v309 = vld [vmem:[%s304 + $0x10] sm:$0xff]
        %v310 = vld [vmem:[%s304 + $0x18] sm:$0xff]
        %v311 = vld [vmem:[%s1] sm:$0xff]
        %v312 = vld [vmem:[%s1 + $0x8] sm:$0xff]
        %v313 = vld [vmem:[%s1 + $0x10] sm:$0xff]
        %v314 = vld [vmem:[%s1 + $0x18] sm:$0xff]
        %v315 = vld [vmem:[%s1 + $0x20] sm:$0xff]
        %v316 = vld [vmem:[%s1 + $0x28] sm:$0xff]
        %v317 = vld [vmem:[%s1 + $0x30] sm:$0xff]
        %v318 = vld [vmem:[%s1 + $0x38] sm:$0xff]
        %v319 = vld [vmem:[%s1 + $0x40] sm:$0xff]
        %v320 = vld [vmem:[%s1 + $0x48] sm:$0xff]
        %v321 = vld [vmem:[%s1 + $0x50] sm:$0xff]
        %v322 = vld [vmem:[%s1 + $0x58] sm:$0xff]
        %v323 = vld [vmem:[%s1 + $0x60] sm:$0xff]
        %v324 = vld [vmem:[%s1 + $0x68] sm:$0xff]
        %v325 = vld [vmem:[%s1 + $0x70] sm:$0xff]
        %v326 = vld [vmem:[%s1 + $0x78] sm:$0xff]
        %v327 = vld [vmem:[%s2] sm:$0x1]
        %v329 = vlaneseq
        %v330 = vshrl.u32 %v329, 7
        %v331 = vsub.s32 0, %v330
        %v332 = vrot.slane %v327, %v331
        %334 = vmatprep.subr.mxu0 0.0
        %335 = vmatpush1.msra.mxu0 %v326
        %336 = vmatprep.subr.mxu0 0.0
        %337 = vmatpush1.msra.mxu0 %v325
        %338 = vmatprep.subr.mxu0 0.0
        %339 = vmatpush1.msra.mxu0 %v324
        %340 = vmatprep.subr.mxu0 0.0
        %341 = vmatpush1.msra.mxu0 %v323
        %342 = vmatprep.subr.mxu0 0.0
        %343 = vmatpush1.msra.mxu0 %v322
        %344 = vmatprep.subr.mxu0 0.0
        %345 = vmatpush1.msra.mxu0 %v321
        %346 = vmatprep.subr.mxu0 0.0
        %347 = vmatpush1.msra.mxu0 %v320
        %348 = vmatprep.subr.mxu0 0.0
        %349 = vmatpush1.msra.mxu0 %v319
        %350 = vmatprep.subr.mxu0 0.0
        %351 = vmatpush1.msra.mxu0 %v318
        %352 = vmatprep.subr.mxu0 0.0
        %353 = vmatpush1.msra.mxu0 %v317
        %354 = vmatprep.subr.mxu0 0.0
        %355 = vmatpush1.msra.mxu0 %v316
        %356 = vmatprep.subr.mxu0 0.0
        %357 = vmatpush1.msra.mxu0 %v315
        %358 = vmatprep.subr.mxu0 0.0
        %359 = vmatpush1.msra.mxu0 %v314
        %360 = vmatprep.subr.mxu0 0.0
        %361 = vmatpush1.msra.mxu0 %v313
        %362 = vmatprep.subr.mxu0 0.0
        %363 = vmatpush1.msra.mxu0 %v312
        %364 = vmatprep.subr.mxu0 0.0
        %365 = vmatpush1.msra.mxu0 %v311
        %366 = vmatprep.subr.mxu0 0.0
        %367 = vmatpush2.msra.mxu0 0.0
        %368 = vmatprep.subr.mxu0 0.0
        %369 = vmatpush2.msra.mxu0 0.0
        %370 = vmatprep.subr.mxu0 0.0
        %371 = vmatpush2.msra.mxu0 0.0
        %372 = vmatprep.subr.mxu0 0.0
        %373 = vmatpush2.msra.mxu0 0.0
        %374 = vmatprep.subr.mxu0 0.0
        %375 = vmatpush2.msra.mxu0 0.0
        %376 = vmatprep.subr.mxu0 0.0
        %377 = vmatpush2.msra.mxu0 0.0
        %378 = vmatprep.subr.mxu0 0.0
        %379 = vmatpush2.msra.mxu0 0.0
        %380 = vmatprep.subr.mxu0 0.0
        %381 = vmatpush2.msra.mxu0 0.0
        %382 = vmatprep.subr.mxu0 0.0
        %383 = vmatpush2.msra.mxu0 0.0
        %384 = vmatprep.subr.mxu0 0.0
        %385 = vmatpush2.msra.mxu0 0.0
        %386 = vmatprep.subr.mxu0 0.0
        %387 = vmatpush2.msra.mxu0 0.0
        %388 = vmatprep.subr.mxu0 0.0
        %389 = vmatpush2.msra.mxu0 0.0
        %390 = vmatprep.subr.mxu0 0.0
        %391 = vmatpush2.msra.mxu0 0.0
        %392 = vmatprep.subr.mxu0 0.0
        %393 = vmatpush2.msra.mxu0 0.0
        %394 = vmatprep.subr.mxu0 0.0
        %395 = vmatpush2.msra.mxu0 0.0
        %396 = vmatprep.subr.mxu0 0.0
        %397 = vmatpush2.msra.mxu0 0.0
        %398 = vmatprep.mubr.f32.mxu0 0.0
        %399 = vmatmul.mubr.f32.gmra.mxu0 %v307
        %v400 = vpop.f32.mrf.mxu0
        %v401 = vadd.f32 %v332, %v400
        %v402 = vpop.f32.mrf.mxu0
        %403 = vmatprep.mubr.f32.mxu0 0.0
        %404 = vmatmul.mubr.f32.gmra.mxu0 %v308
        %v405 = vpop.f32.mrf.mxu0
        %v406 = vadd.f32 %v332, %v405
        %v407 = vpop.f32.mrf.mxu0
        %408 = vmatprep.mubr.f32.mxu0 0.0
        %409 = vmatmul.mubr.f32.gmra.mxu0 %v309
        %v410 = vpop.f32.mrf.mxu0
        %v411 = vadd.f32 %v332, %v410
        %v412 = vpop.f32.mrf.mxu0
        %413 = vmatprep.mubr.f32.mxu0 0.0
        %414 = vmatmul.mubr.f32.gmra.mxu0 %v310
        %v415 = vpop.f32.mrf.mxu0
        %v416 = vadd.f32 %v332, %v415
        %v417 = vpop.f32.mrf.mxu0
        %418 = vdwg.mxu0
        %v419 = vmax.f32 %v401, 0.0
        %v420 = vmax.f32 %v406, 0.0
        %v421 = vmax.f32 %v411, 0.0
        %v422 = vmax.f32 %v416, 0.0
        %vm423 = vcmask 523264
        %424 = vst.msk [vmem:[%s299] sm:$0xff] %vm423, %v419
        %425 = vst.msk [vmem:[%s299 + $0x10] sm:$0xff] %vm423, %v420
        %426 = vst.msk [vmem:[%s299 + $0x20] sm:$0xff] %vm423, %v421
        %427 = vst.msk [vmem:[%s299 + $0x30] sm:$0xff] %vm423, %v422
        %v428 = vld [vmem:[%s3] sm:$0xff]
        %v429 = vld [vmem:[%s3 + $0x8] sm:$0xff]
        %v430 = vld [vmem:[%s3 + $0x10] sm:$0xff]
        %v431 = vld [vmem:[%s3 + $0x18] sm:$0xff]
        %v432 = vld [vmem:[%s3 + $0x20] sm:$0xff]
        %v433 = vld [vmem:[%s3 + $0x28] sm:$0xff]
        %v434 = vld [vmem:[%s3 + $0x30] sm:$0xff]
        %v435 = vld [vmem:[%s3 + $0x38] sm:$0xff]
        %v436 = vld [vmem:[%s4] sm:$0x1]
        %v438 = vlaneseq
        %v439 = vshrl.u32 %v438, 7
        %v440 = vsub.s32 0, %v439
        %v441 = vrot.slane %v436, %v440
        %v444 = vsel %vm423, %v419, 0
        %v447 = vsel %vm423, %v420, 0
        %v450 = vsel %vm423, %v421, 0
        %v453 = vsel %vm423, %v422, 0
        %455 = vmatprep.subr.mxu0 0.0
        %456 = vmatpush1.msra.mxu0 0.0
        %457 = vmatprep.subr.mxu0 0.0
        %458 = vmatpush1.msra.mxu0 0.0
        %459 = vmatprep.subr.mxu0 0.0
        %460 = vmatpush1.msra.mxu0 0.0
        %461 = vmatprep.subr.mxu0 0.0
        %462 = vmatpush1.msra.mxu0 0.0
        %463 = vmatprep.subr.mxu0 0.0
        %464 = vmatpush1.msra.mxu0 0.0
        %465 = vmatprep.subr.mxu0 0.0
        %466 = vmatpush1.msra.mxu0 0.0
        %467 = vmatprep.subr.mxu0 0.0
        %468 = vmatpush1.msra.mxu0 0.0
        %469 = vmatprep.subr.mxu0 0.0
        %470 = vmatpush1.msra.mxu0 0.0
        %471 = vmatprep.subr.mxu0 0.0
        %472 = vmatpush1.msra.mxu0 %v435
        %473 = vmatprep.subr.mxu0 0.0
        %474 = vmatpush1.msra.mxu0 %v434
        %475 = vmatprep.subr.mxu0 0.0
        %476 = vmatpush1.msra.mxu0 %v433
        %477 = vmatprep.subr.mxu0 0.0
        %478 = vmatpush1.msra.mxu0 %v432
        %479 = vmatprep.subr.mxu0 0.0
        %480 = vmatpush1.msra.mxu0 %v431
        %481 = vmatprep.subr.mxu0 0.0
        %482 = vmatpush1.msra.mxu0 %v430
        %483 = vmatprep.subr.mxu0 0.0
        %484 = vmatpush1.msra.mxu0 %v429
        %485 = vmatprep.subr.mxu0 0.0
        %486 = vmatpush1.msra.mxu0 %v428
        %487 = vmatprep.subr.mxu0 0.0
        %488 = vmatpush2.msra.mxu0 0.0
        %489 = vmatprep.subr.mxu0 0.0
        %490 = vmatpush2.msra.mxu0 0.0
        %491 = vmatprep.subr.mxu0 0.0
        %492 = vmatpush2.msra.mxu0 0.0
        %493 = vmatprep.subr.mxu0 0.0
        %494 = vmatpush2.msra.mxu0 0.0
        %495 = vmatprep.subr.mxu0 0.0
        %496 = vmatpush2.msra.mxu0 0.0
        %497 = vmatprep.subr.mxu0 0.0
        %498 = vmatpush2.msra.mxu0 0.0
        %499 = vmatprep.subr.mxu0 0.0
        %500 = vmatpush2.msra.mxu0 0.0
        %501 = vmatprep.subr.mxu0 0.0
        %502 = vmatpush2.msra.mxu0 0.0
        %503 = vmatprep.subr.mxu0 0.0
        %504 = vmatpush2.msra.mxu0 0.0
        %505 = vmatprep.subr.mxu0 0.0
        %506 = vmatpush2.msra.mxu0 0.0
        %507 = vmatprep.subr.mxu0 0.0
        %508 = vmatpush2.msra.mxu0 0.0
        %509 = vmatprep.subr.mxu0 0.0
        %510 = vmatpush2.msra.mxu0 0.0
        %511 = vmatprep.subr.mxu0 0.0
        %512 = vmatpush2.msra.mxu0 0.0
        %513 = vmatprep.subr.mxu0 0.0
        %514 = vmatpush2.msra.mxu0 0.0
        %515 = vmatprep.subr.mxu0 0.0
        %516 = vmatpush2.msra.mxu0 0.0
        %517 = vmatprep.subr.mxu0 0.0
        %518 = vmatpush2.msra.mxu0 0.0
        %519 = vmatprep.mubr.f32.mxu0 0.0
        %520 = vmatmul.mubr.f32.gmra.mxu0 %v444
        %v521 = vpop.f32.mrf.mxu0
        %v522 = vadd.f32 %v441, %v521
        %v523 = vpop.f32.mrf.mxu0
        %524 = vmatprep.mubr.f32.mxu0 0.0
        %525 = vmatmul.mubr.f32.gmra.mxu0 %v447
        %v526 = vpop.f32.mrf.mxu0
        %v527 = vadd.f32 %v441, %v526
        %v528 = vpop.f32.mrf.mxu0
        %529 = vmatprep.mubr.f32.mxu0 0.0
        %530 = vmatmul.mubr.f32.gmra.mxu0 %v450
        %v531 = vpop.f32.mrf.mxu0
        %v532 = vadd.f32 %v441, %v531
        %v533 = vpop.f32.mrf.mxu0
        %534 = vmatprep.mubr.f32.mxu0 0.0
        %535 = vmatmul.mubr.f32.gmra.mxu0 %v453
        %v536 = vpop.f32.mrf.mxu0
        %v537 = vadd.f32 %v441, %v536
        %v538 = vpop.f32.mrf.mxu0
        %539 = vdwg.mxu0
        %v540 = vmax.f32 %v522, 0.0
        %v541 = vmax.f32 %v527, 0.0
        %v542 = vmax.f32 %v532, 0.0
        %v543 = vmax.f32 %v537, 0.0
        %548 = vrot.lane.b32.xlu0 %v540, 64
        %v549 = vpop.permute.xlu0 %548
        %550 = vrot.lane.b32.xlu0 %v541, 64
        %v551 = vpop.permute.xlu0 %550
        %552 = vrot.lane.b32.xlu0 %v542, 64
        %v553 = vpop.permute.xlu0 %552
        %554 = vrot.lane.b32.xlu0 %v543, 64
        %v555 = vpop.permute.xlu0 %554
        %vm560 = vcmask 785920
        %561 = vst.msk [vmem:[%s299] sm:$0xff] %vm560, %v549
        %562 = vst.msk [vmem:[%s299 + $0x10] sm:$0xff] %vm560, %v551
        %563 = vst.msk [vmem:[%s299 + $0x20] sm:$0xff] %vm560, %v553
        %564 = vst.msk [vmem:[%s299 + $0x30] sm:$0xff] %vm560, %v555
        %v565 = vld [vmem:[%s5] sm:$0xff]
        %v566 = vld [vmem:[%s5 + $0x8] sm:$0xff]
        %v567 = vld [vmem:[%s5 + $0x10] sm:$0xff]
        %v568 = vld [vmem:[%s5 + $0x18] sm:$0xff]
        %v569 = vld [vmem:[%s6] sm:$0x1]
        %v571 = vlaneseq
        %v572 = vshrl.u32 %v571, 7
        %v573 = vsub.s32 0, %v572
        %v574 = vrot.slane %v569, %v573
        %vm576 = vcmask 261120
        %v577 = vsel %vm576, %v540, 0
        %v579 = vsel %vm576, %v541, 0
        %v581 = vsel %vm576, %v542, 0
        %v583 = vsel %vm576, %v543, 0
        %585 = vmatprep.subr.mxu0 0.0
        %586 = vmatpush1.msra.mxu0 0.0
        %587 = vmatprep.subr.mxu0 0.0
        %588 = vmatpush1.msra.mxu0 0.0
        %589 = vmatprep.subr.mxu0 0.0
        %590 = vmatpush1.msra.mxu0 0.0
        %591 = vmatprep.subr.mxu0 0.0
        %592 = vmatpush1.msra.mxu0 0.0
        %593 = vmatprep.subr.mxu0 0.0
        %594 = vmatpush1.msra.mxu0 0.0
        %595 = vmatprep.subr.mxu0 0.0
        %596 = vmatpush1.msra.mxu0 0.0
        %597 = vmatprep.subr.mxu0 0.0
        %598 = vmatpush1.msra.mxu0 0.0
        %599 = vmatprep.subr.mxu0 0.0
        %600 = vmatpush1.msra.mxu0 0.0
        %601 = vmatprep.subr.mxu0 0.0
        %602 = vmatpush1.msra.mxu0 0.0
        %603 = vmatprep.subr.mxu0 0.0
        %604 = vmatpush1.msra.mxu0 0.0
        %605 = vmatprep.subr.mxu0 0.0
        %606 = vmatpush1.msra.mxu0 0.0
        %607 = vmatprep.subr.mxu0 0.0
        %608 = vmatpush1.msra.mxu0 0.0
        %609 = vmatprep.subr.mxu0 0.0
        %610 = vmatpush1.msra.mxu0 %v568
        %611 = vmatprep.subr.mxu0 0.0
        %612 = vmatpush1.msra.mxu0 %v567
        %613 = vmatprep.subr.mxu0 0.0
        %614 = vmatpush1.msra.mxu0 %v566
        %615 = vmatprep.subr.mxu0 0.0
        %616 = vmatpush1.msra.mxu0 %v565
        %617 = vmatprep.subr.mxu0 0.0
        %618 = vmatpush2.msra.mxu0 0.0
        %619 = vmatprep.subr.mxu0 0.0
        %620 = vmatpush2.msra.mxu0 0.0
        %621 = vmatprep.subr.mxu0 0.0
        %622 = vmatpush2.msra.mxu0 0.0
        %623 = vmatprep.subr.mxu0 0.0
        %624 = vmatpush2.msra.mxu0 0.0
        %625 = vmatprep.subr.mxu0 0.0
        %626 = vmatpush2.msra.mxu0 0.0
        %627 = vmatprep.subr.mxu0 0.0
        %628 = vmatpush2.msra.mxu0 0.0
        %629 = vmatprep.subr.mxu0 0.0
        %630 = vmatpush2.msra.mxu0 0.0
        %631 = vmatprep.subr.mxu0 0.0
        %632 = vmatpush2.msra.mxu0 0.0
        %633 = vmatprep.subr.mxu0 0.0
        %634 = vmatpush2.msra.mxu0 0.0
        %635 = vmatprep.subr.mxu0 0.0
        %636 = vmatpush2.msra.mxu0 0.0
        %637 = vmatprep.subr.mxu0 0.0
        %638 = vmatpush2.msra.mxu0 0.0
        %639 = vmatprep.subr.mxu0 0.0
        %640 = vmatpush2.msra.mxu0 0.0
        %641 = vmatprep.subr.mxu0 0.0
        %642 = vmatpush2.msra.mxu0 0.0
        %643 = vmatprep.subr.mxu0 0.0
        %644 = vmatpush2.msra.mxu0 0.0
        %645 = vmatprep.subr.mxu0 0.0
        %646 = vmatpush2.msra.mxu0 0.0
        %647 = vmatprep.subr.mxu0 0.0
        %648 = vmatpush2.msra.mxu0 0.0
        %649 = vmatprep.mubr.f32.mxu0 0.0
        %650 = vmatmul.mubr.f32.gmra.mxu0 %v577
        %v651 = vpop.f32.mrf.mxu0
        %v652 = vadd.f32 %v574, %v651
        %v653 = vpop.f32.mrf.mxu0
        %654 = vmatprep.mubr.f32.mxu0 0.0
        %655 = vmatmul.mubr.f32.gmra.mxu0 %v579
        %v656 = vpop.f32.mrf.mxu0
        %v657 = vadd.f32 %v574, %v656
        %v658 = vpop.f32.mrf.mxu0
        %659 = vmatprep.mubr.f32.mxu0 0.0
        %660 = vmatmul.mubr.f32.gmra.mxu0 %v581
        %v661 = vpop.f32.mrf.mxu0
        %v662 = vadd.f32 %v574, %v661
        %v663 = vpop.f32.mrf.mxu0
        %664 = vmatprep.mubr.f32.mxu0 0.0
        %665 = vmatmul.mubr.f32.gmra.mxu0 %v583
        %v666 = vpop.f32.mrf.mxu0
        %v667 = vadd.f32 %v574, %v666
        %v668 = vpop.f32.mrf.mxu0
        %669 = vdwg.mxu0
        %v670 = vmax.f32 %v652, 0.0
        %v671 = vmax.f32 %v657, 0.0
        %v672 = vmax.f32 %v662, 0.0
        %v673 = vmax.f32 %v667, 0.0
        %678 = vrot.lane.b32.xlu0 %v670, 96
        %v679 = vpop.permute.xlu0 %678
        %680 = vrot.lane.b32.xlu0 %v671, 96
        %v681 = vpop.permute.xlu0 %680
        %682 = vrot.lane.b32.xlu0 %v672, 96
        %v683 = vpop.permute.xlu0 %682
        %684 = vrot.lane.b32.xlu0 %v673, 96
        %v685 = vpop.permute.xlu0 %684
        %vm690 = vcmask 1048320
        %691 = vst.msk [vmem:[%s299] sm:$0xff] %vm690, %v679
        %692 = vst.msk [vmem:[%s299 + $0x10] sm:$0xff] %vm690, %v681
        %693 = vst.msk [vmem:[%s299 + $0x20] sm:$0xff] %vm690, %v683
        %694 = vst.msk [vmem:[%s299 + $0x30] sm:$0xff] %vm690, %v685
        %s695 = scalar_lea.vmem %s5, 32
        %v696 = vld [vmem:[%s695] sm:$0xff]
        %v697 = vld [vmem:[%s695 + $0x8] sm:$0xff]
        %v698 = vld [vmem:[%s695 + $0x10] sm:$0xff]
        %v699 = vld [vmem:[%s695 + $0x18] sm:$0xff]
        %s700 = scalar_lea.vmem %s6, 1
        %v701 = vld [vmem:[%s700] sm:$0x1]
        %v703 = vlaneseq
        %v704 = vshrl.u32 %v703, 7
        %v705 = vsub.s32 0, %v704
        %v706 = vrot.slane %v701, %v705
        %v708 = vsel %vm576, %v670, 0
        %v710 = vsel %vm576, %v671, 0
        %v712 = vsel %vm576, %v672, 0
        %v714 = vsel %vm576, %v673, 0
        %716 = vmatprep.subr.mxu0 0.0
        %717 = vmatpush1.msra.mxu0 0.0
        %718 = vmatprep.subr.mxu0 0.0
        %719 = vmatpush1.msra.mxu0 0.0
        %720 = vmatprep.subr.mxu0 0.0
        %721 = vmatpush1.msra.mxu0 0.0
        %722 = vmatprep.subr.mxu0 0.0
        %723 = vmatpush1.msra.mxu0 0.0
        %724 = vmatprep.subr.mxu0 0.0
        %725 = vmatpush1.msra.mxu0 0.0
        %726 = vmatprep.subr.mxu0 0.0
        %727 = vmatpush1.msra.mxu0 0.0
        %728 = vmatprep.subr.mxu0 0.0
        %729 = vmatpush1.msra.mxu0 0.0
        %730 = vmatprep.subr.mxu0 0.0
        %731 = vmatpush1.msra.mxu0 0.0
        %732 = vmatprep.subr.mxu0 0.0
        %733 = vmatpush1.msra.mxu0 0.0
        %734 = vmatprep.subr.mxu0 0.0
        %735 = vmatpush1.msra.mxu0 0.0
        %736 = vmatprep.subr.mxu0 0.0
        %737 = vmatpush1.msra.mxu0 0.0
        %738 = vmatprep.subr.mxu0 0.0
        %739 = vmatpush1.msra.mxu0 0.0
        %740 = vmatprep.subr.mxu0 0.0
        %741 = vmatpush1.msra.mxu0 %v699
        %742 = vmatprep.subr.mxu0 0.0
        %743 = vmatpush1.msra.mxu0 %v698
        %744 = vmatprep.subr.mxu0 0.0
        %745 = vmatpush1.msra.mxu0 %v697
        %746 = vmatprep.subr.mxu0 0.0
        %747 = vmatpush1.msra.mxu0 %v696
        %748 = vmatprep.subr.mxu0 0.0
        %749 = vmatpush2.msra.mxu0 0.0
        %750 = vmatprep.subr.mxu0 0.0
        %751 = vmatpush2.msra.mxu0 0.0
        %752 = vmatprep.subr.mxu0 0.0
        %753 = vmatpush2.msra.mxu0 0.0
        %754 = vmatprep.subr.mxu0 0.0
        %755 = vmatpush2.msra.mxu0 0.0
        %756 = vmatprep.subr.mxu0 0.0
        %757 = vmatpush2.msra.mxu0 0.0
        %758 = vmatprep.subr.mxu0 0.0
        %759 = vmatpush2.msra.mxu0 0.0
        %760 = vmatprep.subr.mxu0 0.0
        %761 = vmatpush2.msra.mxu0 0.0
        %762 = vmatprep.subr.mxu0 0.0
        %763 = vmatpush2.msra.mxu0 0.0
        %764 = vmatprep.subr.mxu0 0.0
        %765 = vmatpush2.msra.mxu0 0.0
        %766 = vmatprep.subr.mxu0 0.0
        %767 = vmatpush2.msra.mxu0 0.0
        %768 = vmatprep.subr.mxu0 0.0
        %769 = vmatpush2.msra.mxu0 0.0
        %770 = vmatprep.subr.mxu0 0.0
        %771 = vmatpush2.msra.mxu0 0.0
        %772 = vmatprep.subr.mxu0 0.0
        %773 = vmatpush2.msra.mxu0 0.0
        %774 = vmatprep.subr.mxu0 0.0
        %775 = vmatpush2.msra.mxu0 0.0
        %776 = vmatprep.subr.mxu0 0.0
        %777 = vmatpush2.msra.mxu0 0.0
        %778 = vmatprep.subr.mxu0 0.0
        %779 = vmatpush2.msra.mxu0 0.0
        %780 = vmatprep.mubr.f32.mxu0 0.0
        %781 = vmatmul.mubr.f32.gmra.mxu0 %v708
        %v782 = vpop.f32.mrf.mxu0
        %v783 = vadd.f32 %v706, %v782
        %v784 = vpop.f32.mrf.mxu0
        %785 = vmatprep.mubr.f32.mxu0 0.0
        %786 = vmatmul.mubr.f32.gmra.mxu0 %v710
        %v787 = vpop.f32.mrf.mxu0
        %v788 = vadd.f32 %v706, %v787
        %v789 = vpop.f32.mrf.mxu0
        %790 = vmatprep.mubr.f32.mxu0 0.0
        %791 = vmatmul.mubr.f32.gmra.mxu0 %v712
        %v792 = vpop.f32.mrf.mxu0
        %v793 = vadd.f32 %v706, %v792
        %v794 = vpop.f32.mrf.mxu0
        %795 = vmatprep.mubr.f32.mxu0 0.0
        %796 = vmatmul.mubr.f32.gmra.mxu0 %v714
        %v797 = vpop.f32.mrf.mxu0
        %v798 = vadd.f32 %v706, %v797
        %v799 = vpop.f32.mrf.mxu0
        %800 = vdwg.mxu0
        %v801 = vmax.f32 %v783, 0.0
        %v802 = vmax.f32 %v788, 0.0
        %v803 = vmax.f32 %v793, 0.0
        %v804 = vmax.f32 %v798, 0.0
        %805 = vst.msk [vmem:[%s299 + $0x8] sm:$0xff] %vm576, %v801
        %806 = vst.msk [vmem:[%s299 + $0x18] sm:$0xff] %vm576, %v802
        %807 = vst.msk [vmem:[%s299 + $0x28] sm:$0xff] %vm576, %v803
        %808 = vst.msk [vmem:[%s299 + $0x38] sm:$0xff] %vm576, %v804
        %v809 = vld [vmem:[%s7] sm:$0xff]
        %v810 = vld [vmem:[%s7 + $0x8] sm:$0xff]
        %v811 = vld [vmem:[%s7 + $0x10] sm:$0xff]
        %v812 = vld [vmem:[%s7 + $0x18] sm:$0xff]
        %v814 = vsel %vm576, %v801, 0
        %v817 = vsel %vm576, %v802, 0
        %v820 = vsel %vm576, %v803, 0
        %v823 = vsel %vm576, %v804, 0
        %825 = vmatprep.subr.mxu0 0.0
        %826 = vmatpush1.msra.mxu0 0.0
        %827 = vmatprep.subr.mxu0 0.0
        %828 = vmatpush1.msra.mxu0 0.0
        %829 = vmatprep.subr.mxu0 0.0
        %830 = vmatpush1.msra.mxu0 0.0
        %831 = vmatprep.subr.mxu0 0.0
        %832 = vmatpush1.msra.mxu0 0.0
        %833 = vmatprep.subr.mxu0 0.0
        %834 = vmatpush1.msra.mxu0 0.0
        %835 = vmatprep.subr.mxu0 0.0
        %836 = vmatpush1.msra.mxu0 0.0
        %837 = vmatprep.subr.mxu0 0.0
        %838 = vmatpush1.msra.mxu0 0.0
        %839 = vmatprep.subr.mxu0 0.0
        %840 = vmatpush1.msra.mxu0 0.0
        %841 = vmatprep.subr.mxu0 0.0
        %842 = vmatpush1.msra.mxu0 0.0
        %843 = vmatprep.subr.mxu0 0.0
        %844 = vmatpush1.msra.mxu0 0.0
        %845 = vmatprep.subr.mxu0 0.0
        %846 = vmatpush1.msra.mxu0 0.0
        %847 = vmatprep.subr.mxu0 0.0
        %848 = vmatpush1.msra.mxu0 0.0
        %849 = vmatprep.subr.mxu0 0.0
        %850 = vmatpush1.msra.mxu0 %v812
        %851 = vmatprep.subr.mxu0 0.0
        %852 = vmatpush1.msra.mxu0 %v811
        %853 = vmatprep.subr.mxu0 0.0
        %854 = vmatpush1.msra.mxu0 %v810
        %855 = vmatprep.subr.mxu0 0.0
        %856 = vmatpush1.msra.mxu0 %v809
        %857 = vmatprep.subr.mxu0 0.0
        %858 = vmatpush2.msra.mxu0 0.0
        %859 = vmatprep.subr.mxu0 0.0
        %860 = vmatpush2.msra.mxu0 0.0
        %861 = vmatprep.subr.mxu0 0.0
        %862 = vmatpush2.msra.mxu0 0.0
        %863 = vmatprep.subr.mxu0 0.0
        %864 = vmatpush2.msra.mxu0 0.0
        %865 = vmatprep.subr.mxu0 0.0
        %866 = vmatpush2.msra.mxu0 0.0
        %867 = vmatprep.subr.mxu0 0.0
        %868 = vmatpush2.msra.mxu0 0.0
        %869 = vmatprep.subr.mxu0 0.0
        %870 = vmatpush2.msra.mxu0 0.0
        %871 = vmatprep.subr.mxu0 0.0
        %872 = vmatpush2.msra.mxu0 0.0
        %873 = vmatprep.subr.mxu0 0.0
        %874 = vmatpush2.msra.mxu0 0.0
        %875 = vmatprep.subr.mxu0 0.0
        %876 = vmatpush2.msra.mxu0 0.0
        %877 = vmatprep.subr.mxu0 0.0
        %878 = vmatpush2.msra.mxu0 0.0
        %879 = vmatprep.subr.mxu0 0.0
        %880 = vmatpush2.msra.mxu0 0.0
        %881 = vmatprep.subr.mxu0 0.0
        %882 = vmatpush2.msra.mxu0 0.0
        %883 = vmatprep.subr.mxu0 0.0
        %884 = vmatpush2.msra.mxu0 0.0
        %885 = vmatprep.subr.mxu0 0.0
        %886 = vmatpush2.msra.mxu0 0.0
        %887 = vmatprep.subr.mxu0 0.0
        %888 = vmatpush2.msra.mxu0 0.0
        %889 = vmatprep.mubr.f32.mxu0 0.0
        %890 = vmatmul.mubr.f32.gmra.mxu0 %v814
        %v891 = vpop.f32.mrf.mxu0
        %v892 = vadd.f32 0.0, %v891
        %v893 = vpop.f32.mrf.mxu0
        %894 = vmatprep.mubr.f32.mxu0 0.0
        %895 = vmatmul.mubr.f32.gmra.mxu0 %v817
        %v896 = vpop.f32.mrf.mxu0
        %v897 = vadd.f32 0.0, %v896
        %v898 = vpop.f32.mrf.mxu0
        %899 = vmatprep.mubr.f32.mxu0 0.0
        %900 = vmatmul.mubr.f32.gmra.mxu0 %v820
        %v901 = vpop.f32.mrf.mxu0
        %v902 = vadd.f32 0.0, %v901
        %v903 = vpop.f32.mrf.mxu0
        %904 = vmatprep.mubr.f32.mxu0 0.0
        %905 = vmatmul.mubr.f32.gmra.mxu0 %v823
        %v906 = vpop.f32.mrf.mxu0
        %v907 = vadd.f32 0.0, %v906
        %v908 = vpop.f32.mrf.mxu0
        %909 = vdwg.mxu0
        %914 = vrot.lane.b32.xlu0 %v892, 32
        %v915 = vpop.permute.xlu0 %914
        %916 = vrot.lane.b32.xlu0 %v897, 32
        %v917 = vpop.permute.xlu0 %916
        %918 = vrot.lane.b32.xlu0 %v902, 32
        %v919 = vpop.permute.xlu0 %918
        %920 = vrot.lane.b32.xlu0 %v907, 32
        %v921 = vpop.permute.xlu0 %920
        %vm926 = vcmask 1047808
        %927 = vst.msk [vmem:[%s299 + $0x8] sm:$0xff] %vm926, %v915
        %928 = vst.msk [vmem:[%s299 + $0x18] sm:$0xff] %vm926, %v917
        %929 = vst.msk [vmem:[%s299 + $0x28] sm:$0xff] %vm926, %v919
        %930 = vst.msk [vmem:[%s299 + $0x38] sm:$0xff] %vm926, %v921
        %s931 = sand.u32 %s203, 1
        %s932 = scalar_lea.sflag [#allocation3], %s931
        %s933 = sand.u32 %s203, 1
        %s934 = smul.addr %s933, 64
        %s935 = scalar_lea.vmem [#allocation2], %s934
        // Predicated region
        $region53: #{tpu_custom_call.1} parent=51 // pred_check
          %p936 = pneg %p213
        $region54: #{tpu_custom_call.1} parent=51 // pred_check_branch
          %938 = sbr.rel (%p936) target = $region56
        $region55: #{tpu_custom_call.1} parent=51 // pred_region
          %s939 = smul.u32 4, %s22
          %s941 = ssub.s32 1024, 1024
          %942 = vsyncadd %s932, %s941
          %s943 = smul.addr %s939, 2
          %s944 = smul.addr %s943, 128
          %s945 = scalar_lea.hbm %s8, %s944
          %s946 = sshll.u32 %s935, 4
          %s947 = int_to_ptr.vmem [resolvable:$true] %s946
          %952 = dma.vmem_to_hbm [thread:$0]  %s947, 1024, %s945, %s932, 256, 256, 16
        $region56: #{tpu_custom_call.1} parent=51 // pred_fallthru
          _
      $region52: #{tpu_custom_call.1} parent=5 // pred_fallthru
        _
      %p953 = scmp.le.s32.totalorder 2, %s17
      // Predicated region
      $region57: #{tpu_custom_call.1} parent=5 // pred_check
        %p954 = pneg %p953
      $region58: #{tpu_custom_call.1} parent=5 // pred_check_branch
        %956 = sbr.rel (%p954) target = $region60
      $region59: #{tpu_custom_call.1} parent=5 // pred_region
        %s957 = ssub.s32 %s17, 2
        // Predicated region
        $region61: #{tpu_custom_call.1} parent=59 // pred_check
          %p958 = pneg %p219
        $region62: #{tpu_custom_call.1} parent=59 // pred_check_branch
          %960 = sbr.rel (%p958) target = $region64
        $region63: #{tpu_custom_call.1} parent=59 // pred_region
          %s961 = sand.u32 %s204, 1
          %s962 = scalar_lea.sflag [#allocation3], %s961
          %s963 = sand.u32 %s204, 1
          %s964 = smul.addr %s963, 64
          %s965 = scalar_lea.vmem [#allocation2], %s964
          %966 = dma.done %s962, 1024
        $region64: #{tpu_custom_call.1} parent=59 // pred_fallthru
          _
      $region60: #{tpu_custom_call.1} parent=5 // pred_fallthru
        _
    $region6: #{tpu_custom_call.1} parent=1 // loop_footer
      %s21 = sadd.s32 1, %s17
    $region7: #{tpu_custom_call.1} parent=1 // loop_footer_branch
      %16 = sbr.rel target = $region3
    $region8: #{tpu_custom_call.1} parent=1 // loop_exit
      _
    %967 = vsyncpa [#allocation3], 1
    %s968 = scalar_lea.sflag [#allocation3], 1
    %969 = vsyncpa %s968, 1

</llo_original>
